<compile_context>
chip_gen: v7x
topology: tpu7x:2x2x1
jax: 0.10.0
libtpu: 0.0.40
codegen_flags: <defaults>
</compile_context>

<pallas_src>
import jax
import jax.numpy as jnp
from jax.experimental import pallas as pl
from jax.experimental.pallas import tpu as pltpu

_LANE = 128
_SUBLANE = 8


def _round_up(n, m):
    return ((n + m - 1) // m) * m


def _pad2(a, rows, cols):
    r, c = a.shape
    return jnp.pad(a, ((0, rows - r), (0, cols - c)))


def _qnet_kernel(x_ref, w1_ref, b1_ref, w2_ref, b2_ref, w3_ref, b3_ref, o_ref):
    """Fused 3-layer MLP on one (tb, .) batch tile. All dots accumulate in f32."""
    n_actions = o_ref.shape[-1]
    x = x_ref[...]

    h1 = jnp.dot(x, w1_ref[...], preferred_element_type=jnp.float32) + b1_ref[...]
    h1 = jnp.maximum(h1, 0.0)

    # Casts below only feed the MXU (bf16 path); elementwise work stays f32.
    h2 = jnp.dot(h1.astype(w2_ref.dtype), w2_ref[...],
                 preferred_element_type=jnp.float32) + b2_ref[...]
    h2 = jnp.maximum(h2, 0.0)

    out = jnp.dot(h2.astype(w3_ref.dtype), w3_ref[...],
                  preferred_element_type=jnp.float32) + b3_ref[...]

    # Narrow, masked store: only the real action columns go back to HBM.
    o_ref[...] = out[:, :n_actions].astype(o_ref.dtype)


def prepare_params(params, *, compute_dtype=jnp.float32):
    """One-time (off the hot path) padding + casting of weights for the kernel.

    Hidden/output widths are zero-padded to 128 lanes (exact: ReLU(0)=0 cols,
    zero weight rows add nothing); obs_dim is padded only to an 8-sublane
    multiple. Weights are cast to compute_dtype; biases stay f32.
    """
    w1 = jnp.asarray(params["w1"])
    w2 = jnp.asarray(params["w2"])
    w3 = jnp.asarray(params["w3"])
    b1 = jnp.asarray(params["b1"]).reshape(1, -1)
    b2 = jnp.asarray(params["b2"]).reshape(1, -1)
    b3 = jnp.asarray(params["b3"]).reshape(1, -1)

    obs_dim, h1_dim = w1.shape
    h2_dim = w2.shape[1]
    n_actions = w3.shape[1]

    obs_p = _round_up(obs_dim, _SUBLANE)
    h1p = _round_up(h1_dim, _LANE)
    h2p = _round_up(h2_dim, _LANE)
    outp = _round_up(n_actions, _LANE)

    return {
        "w1": _pad2(w1, obs_p, h1p).astype(compute_dtype),
        "b1": _pad2(b1, 1, h1p).astype(jnp.float32),
        "w2": _pad2(w2, h1p, h2p).astype(compute_dtype),
        "b2": _pad2(b2, 1, h2p).astype(jnp.float32),
        "w3": _pad2(w3, h2p, outp).astype(compute_dtype),
        "b3": _pad2(b3, 1, outp).astype(jnp.float32),
        "dims": (obs_dim, h1_dim, h2_dim, n_actions, obs_p),
    }


def q_network_forward(x, prepped, *, block_batch=4096):
    """x: (batch, obs_dim) float32. prepped: output of prepare_params()."""
    obs_dim, h1_dim, h2_dim, n_actions, obs_p = prepped["dims"]
    w1p, b1p = prepped["w1"], prepped["b1"]
    w2p, b2p = prepped["w2"], prepped["b2"]
    w3p, b3p = prepped["w3"], prepped["b3"]
    compute_dtype = w1p.dtype
    dtype_bytes = jnp.dtype(compute_dtype).itemsize

    batch, xd = x.shape
    assert xd == obs_dim, f"expected obs_dim={obs_dim}, got {xd}"

    # Exact sublane pad of the feature dim (zero cols x zero w1 rows).
    if obs_p != obs_dim:
        x = jnp.pad(x, ((0, 0), (0, obs_p - obs_dim)))
    x = x.astype(compute_dtype)

    # Batch tile: multiple of 8; for large batches force >= 2 grid steps so
    # "parallel" semantics can shard across both v7x TensorCores.
    if batch > 2 * _SUBLANE:
        tb = min(_round_up(block_batch, _SUBLANE),
                 _round_up(-(-batch // 2), _SUBLANE))
    else:
        tb = _round_up(batch, _SUBLANE)

    # Cap tb against a VMEM budget (x/out tiles double-buffered + resident
    # weights + f32 intermediates) so large obs_dim can't blow v7x's VMEM.
    weight_bytes = sum(a.size * a.dtype.itemsize
                       for a in (w1p, b1p, w2p, b2p, w3p, b3p))
    per_row_bytes = (2 * obs_p * dtype_bytes          # x tile (double-buffered)
                     + 2 * n_actions * 4              # out tile (double-buffered)
                     + 3 * _LANE * 4)                 # f32 h1/h2/out intermediates
    vmem_budget = 24 * 1024 * 1024
    tb_cap = max(_SUBLANE,
                 ((vmem_budget - weight_bytes) // per_row_bytes)
                 // _SUBLANE * _SUBLANE)
    tb = max(_SUBLANE, min(tb, tb_cap))

    grid = (pl.cdiv(batch, tb),)

    # Cost estimate with true (unpadded) widths and the narrowed output.
    flops = 2 * batch * (obs_dim * h1_dim + h1_dim * h2_dim + h2_dim * n_actions)
    bytes_accessed = (batch * obs_p * dtype_bytes
                      + weight_bytes
                      + batch * n_actions * 4)
    cost = pl.CostEstimate(flops=flops, transcendentals=0,
                           bytes_accessed=bytes_accessed)

    return pl.pallas_call(
        _qnet_kernel,
        out_shape=jax.ShapeDtypeStruct((batch, n_actions), jnp.float32),
        grid=grid,
        in_specs=[
            pl.BlockSpec((tb, obs_p), lambda i: (i, 0)),   # x: tiled over batch
            pl.BlockSpec(w1p.shape, lambda i: (0, 0)),     # weights/biases stay
            pl.BlockSpec(b1p.shape, lambda i: (0, 0)),     # VMEM-resident
            pl.BlockSpec(w2p.shape, lambda i: (0, 0)),     # (fixed block index,
            pl.BlockSpec(b2p.shape, lambda i: (0, 0)),     #  Pallas skips re-DMA)
            pl.BlockSpec(w3p.shape, lambda i: (0, 0)),
            pl.BlockSpec(b3p.shape, lambda i: (0, 0)),
        ],
        # Narrow output block: last dim equals the full array dim (legal per the
        # (8,128) rule); the ragged last batch tile's OOB rows are masked.
        out_specs=pl.BlockSpec((tb, n_actions), lambda i: (i, 0)),
        compiler_params=pltpu.CompilerParams(
            dimension_semantics=("parallel",),
            vmem_limit_bytes=32 * 1024 * 1024),
        cost_estimate=cost,
    )(x, w1p, b1p, w2p, b2p, w3p, b3p)


def init_params(key, obs_dim, n_actions):
    """Deterministic init matching the module's layer shapes (synthetic weights)."""
    k1, k2, k3, k4, k5, k6 = jax.random.split(key, 6)

    def lin(kw, kb, fan_in, fan_out):
        # PyTorch default Linear init: U(-1/sqrt(fan_in), 1/sqrt(fan_in))
        bound = 1.0 / jnp.sqrt(jnp.float32(fan_in))
        w = jax.random.uniform(kw, (fan_in, fan_out), jnp.float32, -bound, bound)
        b = jax.random.uniform(kb, (1, fan_out), jnp.float32, -bound, bound)
        return w, b

    w1, b1 = lin(k1, k2, obs_dim, 120)
    w2, b2 = lin(k3, k4, 120, 84)
    w3, b3 = lin(k5, k6, 84, n_actions)
    return {"w1": w1, "b1": b1, "w2": w2, "b2": b2, "w3": w3, "b3": b3}


def q_network_ref(x, p):
    h1 = jnp.maximum(x @ p["w1"] + p["b1"], 0.0)
    h2 = jnp.maximum(h1 @ p["w2"] + p["b2"], 0.0)
    return h2 @ p["w3"] + p["b3"]


if __name__ == "__main__":
    key = jax.random.PRNGKey(0)
    kx, kp = jax.random.split(key)

    batch, obs_dim, n_actions = 8, 4, 2  # CartPole-like env
    x = jax.random.normal(kx, (batch, obs_dim), jnp.float32)
    params = init_params(kp, obs_dim, n_actions)

    # f32 path, tiny batch (single grid step); weights prepared once off the hot path.
    prepped_f32 = prepare_params(params, compute_dtype=jnp.float32)
    out = jax.block_until_ready(q_network_forward(x, prepped_f32))
    ref = q_network_ref(x, params)
    assert out.shape == (batch, n_actions)
    assert jnp.allclose(out, ref, atol=1e-4, rtol=1e-4), "f32 mismatch vs reference"

    # bf16-operand MXU path, larger non-aligned batch: 2 grid steps (v7x megacore),
    # ragged last tile handled by masked output writeback (no batch pre-pad).
    # NOTE: x/h1/h2 are quantized to bf16 on this path (weights-and-activations),
    # which can matter for Q-value argmax ties.
    big_batch = 1000
    xb = jax.random.normal(jax.random.PRNGKey(1), (big_batch, obs_dim), jnp.float32)
    prepped_bf16 = prepare_params(params, compute_dtype=jnp.bfloat16)
    out_b = jax.block_until_ready(q_network_forward(xb, prepped_bf16))
    ref_b = q_network_ref(xb, params)
    assert out_b.shape == (big_batch, n_actions)
    assert jnp.allclose(out_b, ref_b, atol=5e-2, rtol=5e-2), "bf16 mismatch vs reference"

    print("KERNEL_OK")
</pallas_src>

<mosaic_0001>
module attributes {stable_mosaic.version = 11 : i64} {
  func.func @_qnet_kernel(%arg0: i32, %arg1: memref<8x8xf32, #tpu.memory_space<vmem>>, %arg2: memref<8x128xf32, #tpu.memory_space<vmem>>, %arg3: memref<1x128xf32, #tpu.memory_space<vmem>>, %arg4: memref<128x128xf32, #tpu.memory_space<vmem>>, %arg5: memref<1x128xf32, #tpu.memory_space<vmem>>, %arg6: memref<128x128xf32, #tpu.memory_space<vmem>>, %arg7: memref<1x128xf32, #tpu.memory_space<vmem>>, %arg8: memref<8x2xf32, #tpu.memory_space<vmem>>) attributes {dimension_semantics = [#tpu.dimension_semantics<parallel>], iteration_bounds = array<i64: 1>, scalar_prefetch = 0 : i64, scratch_operands = 0 : i64, tpu.core_type = #tpu.core_type<tc>, window_params = [{transform_indices = @transform_0, window_bounds = array<i64: 8, 8>}, {pipeline_mode = #tpu.pipeline_mode<synchronous>, transform_indices = @transform_1, window_bounds = array<i64: 8, 128>}, {pipeline_mode = #tpu.pipeline_mode<synchronous>, transform_indices = @transform_2, window_bounds = array<i64: 1, 128>}, {pipeline_mode = #tpu.pipeline_mode<synchronous>, transform_indices = @transform_3, window_bounds = array<i64: 128, 128>}, {pipeline_mode = #tpu.pipeline_mode<synchronous>, transform_indices = @transform_4, window_bounds = array<i64: 1, 128>}, {pipeline_mode = #tpu.pipeline_mode<synchronous>, transform_indices = @transform_5, window_bounds = array<i64: 128, 128>}, {pipeline_mode = #tpu.pipeline_mode<synchronous>, transform_indices = @transform_6, window_bounds = array<i64: 1, 128>}, {transform_indices = @transform_7, window_bounds = array<i64: 8, 2>}]} {
    %c0 = arith.constant 0 : index
    %c0_0 = arith.constant 0 : index
    %0 = vector.load %arg1[%c0, %c0_0] : memref<8x8xf32, #tpu.memory_space<vmem>>, vector<8x8xf32>
    %c0_1 = arith.constant 0 : index
    %c0_2 = arith.constant 0 : index
    %1 = vector.load %arg2[%c0_1, %c0_2] : memref<8x128xf32, #tpu.memory_space<vmem>>, vector<8x128xf32>
    %cst = arith.constant dense<0.000000e+00> : vector<8x128xf32>
    %2 = tpu.matmul %0, %1, %cst {dimension_numbers = #tpu.dot_dimension_numbers<[1], [0], [0], [1], [0, 0, 1, 1], [], []>} : vector<8x8xf32>, vector<8x128xf32>, vector<8x128xf32> -> vector<8x128xf32>
    %c0_3 = arith.constant 0 : index
    %c0_4 = arith.constant 0 : index
    %3 = vector.load %arg3[%c0_3, %c0_4] : memref<1x128xf32, #tpu.memory_space<vmem>>, vector<1x128xf32>
    %4 = vector.broadcast %3 : vector<1x128xf32> to vector<8x128xf32>
    %5 = arith.addf %2, %4 : vector<8x128xf32>
    %cst_5 = arith.constant 0.000000e+00 : f32
    %6 = vector.broadcast %cst_5 : f32 to vector<8x128xf32>
    %7 = arith.maximumf %5, %6 : vector<8x128xf32>
    %c0_6 = arith.constant 0 : index
    %c0_7 = arith.constant 0 : index
    %8 = vector.load %arg4[%c0_6, %c0_7] : memref<128x128xf32, #tpu.memory_space<vmem>>, vector<128x128xf32>
    %cst_8 = arith.constant dense<0.000000e+00> : vector<8x128xf32>
    %9 = tpu.matmul %7, %8, %cst_8 {dimension_numbers = #tpu.dot_dimension_numbers<[1], [0], [0], [1], [0, 0, 1, 1], [], []>} : vector<8x128xf32>, vector<128x128xf32>, vector<8x128xf32> -> vector<8x128xf32>
    %c0_9 = arith.constant 0 : index
    %c0_10 = arith.constant 0 : index
    %10 = vector.load %arg5[%c0_9, %c0_10] : memref<1x128xf32, #tpu.memory_space<vmem>>, vector<1x128xf32>
    %11 = vector.broadcast %10 : vector<1x128xf32> to vector<8x128xf32>
    %12 = arith.addf %9, %11 : vector<8x128xf32>
    %cst_11 = arith.constant 0.000000e+00 : f32
    %13 = vector.broadcast %cst_11 : f32 to vector<8x128xf32>
    %14 = arith.maximumf %12, %13 : vector<8x128xf32>
    %c0_12 = arith.constant 0 : index
    %c0_13 = arith.constant 0 : index
    %15 = vector.load %arg6[%c0_12, %c0_13] : memref<128x128xf32, #tpu.memory_space<vmem>>, vector<128x128xf32>
    %cst_14 = arith.constant dense<0.000000e+00> : vector<8x128xf32>
    %16 = tpu.matmul %14, %15, %cst_14 {dimension_numbers = #tpu.dot_dimension_numbers<[1], [0], [0], [1], [0, 0, 1, 1], [], []>} : vector<8x128xf32>, vector<128x128xf32>, vector<8x128xf32> -> vector<8x128xf32>
    %c0_15 = arith.constant 0 : index
    %c0_16 = arith.constant 0 : index
    %17 = vector.load %arg7[%c0_15, %c0_16] : memref<1x128xf32, #tpu.memory_space<vmem>>, vector<1x128xf32>
    %18 = vector.broadcast %17 : vector<1x128xf32> to vector<8x128xf32>
    %19 = arith.addf %16, %18 : vector<8x128xf32>
    %20 = vector.extract_strided_slice %19 {offsets = [0, 0], sizes = [8, 2], strides = [1, 1]} : vector<8x128xf32> to vector<8x2xf32>
    %c0_17 = arith.constant 0 : index
    %c0_18 = arith.constant 0 : index
    %21 = vector.load %arg8[%c0_17, %c0_18] : memref<8x2xf32, #tpu.memory_space<vmem>>, vector<8x2xf32>
    tpu.vector_store %arg8[%c0_17, %c0_18], %20 {strides = array<i32>} : memref<8x2xf32, #tpu.memory_space<vmem>>, vector<8x2xf32>,
    return
  }
  func.func @transform_0(%arg0: i32) -> (i32, i32) {
    %c0_i32 = arith.constant 0 : i32
    %c0_i32_0 = arith.constant 0 : i32
    return %arg0, %c0_i32 : i32, i32
  }
  func.func @transform_1(%arg0: i32) -> (i32, i32) {
    %c0_i32 = arith.constant 0 : i32
    %c0_i32_0 = arith.constant 0 : i32
    %c0_i32_1 = arith.constant 0 : i32
    return %c0_i32, %c0_i32_0 : i32, i32
  }
  func.func @transform_2(%arg0: i32) -> (i32, i32) {
    %c0_i32 = arith.constant 0 : i32
    %c0_i32_0 = arith.constant 0 : i32
    %c0_i32_1 = arith.constant 0 : i32
    return %c0_i32, %c0_i32_0 : i32, i32
  }
  func.func @transform_3(%arg0: i32) -> (i32, i32) {
    %c0_i32 = arith.constant 0 : i32
    %c0_i32_0 = arith.constant 0 : i32
    %c0_i32_1 = arith.constant 0 : i32
    return %c0_i32, %c0_i32_0 : i32, i32
  }
  func.func @transform_4(%arg0: i32) -> (i32, i32) {
    %c0_i32 = arith.constant 0 : i32
    %c0_i32_0 = arith.constant 0 : i32
    %c0_i32_1 = arith.constant 0 : i32
    return %c0_i32, %c0_i32_0 : i32, i32
  }
  func.func @transform_5(%arg0: i32) -> (i32, i32) {
    %c0_i32 = arith.constant 0 : i32
    %c0_i32_0 = arith.constant 0 : i32
    %c0_i32_1 = arith.constant 0 : i32
    return %c0_i32, %c0_i32_0 : i32, i32
  }
  func.func @transform_6(%arg0: i32) -> (i32, i32) {
    %c0_i32 = arith.constant 0 : i32
    %c0_i32_0 = arith.constant 0 : i32
    %c0_i32_1 = arith.constant 0 : i32
    return %c0_i32, %c0_i32_0 : i32, i32
  }
  func.func @transform_7(%arg0: i32) -> (i32, i32) {
    %c0_i32 = arith.constant 0 : i32
    %c0_i32_0 = arith.constant 0 : i32
    return %arg0, %c0_i32 : i32, i32
  }
}

</mosaic_0001>

<llo_original>
// kernel: tpu_custom_call.1
$region0: #{tpu_custom_call.1}
  #allocation0 [shape = 'u32[]', space=smem, size = 0x4, offset = 0x4, fixed_abs, tag = 'smem constant byte address 0x4 - core index']
  #allocation1 [shape = 'u32[144,128]{1,0:T(1,128)}', space=vmem, size = 0x12000, scoped, tag = 'internal scratch']
  %s0 = inlined_call_operand.hbm [shape: f32[8,8], index: 0, kind: input, shape index: {}]
  %s1 = inlined_call_operand.hbm [shape: f32[8,128], index: 1, kind: input, shape index: {}]
  %s2 = inlined_call_operand.vmem [shape: f32[1,128], index: 2, kind: input, shape index: {}]
  %s3 = inlined_call_operand.hbm [shape: f32[128,128], index: 3, kind: input, shape index: {}]
  %s4 = inlined_call_operand.vmem [shape: f32[1,128], index: 4, kind: input, shape index: {}]
  %s5 = inlined_call_operand.hbm [shape: f32[128,128], index: 5, kind: input, shape index: {}]
  %s6 = inlined_call_operand.vmem [shape: f32[1,128], index: 6, kind: input, shape index: {}]
  %s7 = inlined_call_operand.vmem [shape: f32[8,2], index: 7, kind: output, shape index: {}]
  %s8 = sld [smem:[#allocation0]]
  $region54: #{tpu_custom_call.1} parent=0
    _
  %s10 = ssub.s32 1, %s8
  %s11 = scalar_select 0, %s10, %s8
  $region1: #{tpu_custom_call.1} parent=0
    #allocation2 [shape = 'u8[4096]{0}', space=vmem, size = 0x1000, scoped, tag = 'input window, operand 0, single buffered']
    #allocation3 [shape = 's32[1]{0}', space=sflag, size = 0x4, scoped, tag = 'scoped memory for tpu_custom_call.1']
    #allocation4 [shape = 'u8[4096]{0}', space=vmem, size = 0x1000, scoped, tag = 'input window, operand 1, single buffered']
    #allocation5 [shape = 's32[1]{0}', space=sflag, size = 0x4, scoped, tag = 'scoped memory for tpu_custom_call.1']
    #allocation6 [shape = 'u8[65536]{0}', space=vmem, size = 0x10000, scoped, tag = 'input window, operand 3, single buffered']
    #allocation7 [shape = 'u8[65536]{0}', space=vmem, size = 0x10000, scoped, tag = 'input window, operand 5, single buffered']
    #allocation8 [shape = 's32[1]{0}', space=sflag, size = 0x4, scoped, tag = 'scoped memory for tpu_custom_call.1']
    %12 = vsyncpa [#allocation3], 0
    %13 = vsyncpa [#allocation5], 0
    %14 = vsyncpa [#allocation8], 0
    // Predicated region
    $region2: #{tpu_custom_call.1} parent=1 // pred_check
      _
    $region3: #{tpu_custom_call.1} parent=1 // pred_check_branch
      %16 = sbr.rel (0) target = $region5
    $region4: #{tpu_custom_call.1} parent=1 // pred_region
      %s18 = ssub.s32 128, 128
      %19 = vsyncadd [#allocation3], %s18
      %s21 = sshll.u32 [#allocation2], 4
      %s22 = int_to_ptr.vmem [resolvable:$true] %s21
      %24 = dma.hbm_to_vmem [thread:$0]  %s0, 128, %s22, [#allocation3]
    $region5: #{tpu_custom_call.1} parent=1 // pred_fallthru
      _
    // Predicated region
    $region6: #{tpu_custom_call.1} parent=1 // pred_check
      _
    $region7: #{tpu_custom_call.1} parent=1 // pred_check_branch
      %26 = sbr.rel (0) target = $region9
    $region8: #{tpu_custom_call.1} parent=1 // pred_region
      %s28 = ssub.s32 128, 128
      %29 = vsyncadd [#allocation5], %s28
      %s31 = sshll.u32 [#allocation4], 4
      %s32 = int_to_ptr.vmem [resolvable:$true] %s31
      %34 = dma.hbm_to_vmem [thread:$0]  %s1, 128, %s32, [#allocation5]
    $region9: #{tpu_custom_call.1} parent=1 // pred_fallthru
      _
    // Predicated region
    $region10: #{tpu_custom_call.1} parent=1 // pred_check
      _
    $region11: #{tpu_custom_call.1} parent=1 // pred_check_branch
      %36 = sbr.rel (0) target = $region13
    $region12: #{tpu_custom_call.1} parent=1 // pred_region
      _
    $region13: #{tpu_custom_call.1} parent=1 // pred_fallthru
      _
    // Predicated region
    $region14: #{tpu_custom_call.1} parent=1 // pred_check
      _
    $region15: #{tpu_custom_call.1} parent=1 // pred_check_branch
      %38 = sbr.rel (0) target = $region17
    $region16: #{tpu_custom_call.1} parent=1 // pred_region
      %s40 = ssub.s32 2048, 2048
      %41 = vsyncadd [#allocation5], %s40
      %s42 = sshll.u32 [#allocation6], 4
      %s43 = int_to_ptr.vmem [resolvable:$true] %s42
      %48 = dma.hbm_to_vmem [thread:$0]  %s3, 2048, %s43, [#allocation5], 128, 128, 8
    $region17: #{tpu_custom_call.1} parent=1 // pred_fallthru
      _
    // Predicated region
    $region18: #{tpu_custom_call.1} parent=1 // pred_check
      _
    $region19: #{tpu_custom_call.1} parent=1 // pred_check_branch
      %50 = sbr.rel (0) target = $region21
    $region20: #{tpu_custom_call.1} parent=1 // pred_region
      _
    $region21: #{tpu_custom_call.1} parent=1 // pred_fallthru
      _
    // Predicated region
    $region22: #{tpu_custom_call.1} parent=1 // pred_check
      _
    $region23: #{tpu_custom_call.1} parent=1 // pred_check_branch
      %52 = sbr.rel (0) target = $region25
    $region24: #{tpu_custom_call.1} parent=1 // pred_region
      %s54 = ssub.s32 2048, 2048
      %55 = vsyncadd [#allocation8], %s54
      %s56 = sshll.u32 [#allocation7], 4
      %s57 = int_to_ptr.vmem [resolvable:$true] %s56
      %62 = dma.hbm_to_vmem [thread:$0]  %s5, 2048, %s57, [#allocation8], 128, 128, 8
    $region25: #{tpu_custom_call.1} parent=1 // pred_fallthru
      _
    // Predicated region
    $region26: #{tpu_custom_call.1} parent=1 // pred_check
      _
    $region27: #{tpu_custom_call.1} parent=1 // pred_check_branch
      %64 = sbr.rel (0) target = $region29
    $region28: #{tpu_custom_call.1} parent=1 // pred_region
      _
    $region29: #{tpu_custom_call.1} parent=1 // pred_fallthru
      _
    // Predicated region
    $region30: #{tpu_custom_call.1} parent=1 // pred_check
      _
    $region31: #{tpu_custom_call.1} parent=1 // pred_check_branch
      %66 = sbr.rel (0) target = $region33
    $region32: #{tpu_custom_call.1} parent=1 // pred_region
      %67 = dma.done [#allocation3], 128
    $region33: #{tpu_custom_call.1} parent=1 // pred_fallthru
      _
    // Predicated region
    $region34: #{tpu_custom_call.1} parent=1 // pred_check
      _
    $region35: #{tpu_custom_call.1} parent=1 // pred_check_branch
      %69 = sbr.rel (0) target = $region37
    $region36: #{tpu_custom_call.1} parent=1 // pred_region
      %70 = dma.done [#allocation5], 128
    $region37: #{tpu_custom_call.1} parent=1 // pred_fallthru
      _
    // Predicated region
    $region38: #{tpu_custom_call.1} parent=1 // pred_check
      _
    $region39: #{tpu_custom_call.1} parent=1 // pred_check_branch
      %72 = sbr.rel (0) target = $region41
    $region40: #{tpu_custom_call.1} parent=1 // pred_region
      %73 = dma.done [#allocation5], 2048
    $region41: #{tpu_custom_call.1} parent=1 // pred_fallthru
      _
    // Predicated region
    $region42: #{tpu_custom_call.1} parent=1 // pred_check
      _
    $region43: #{tpu_custom_call.1} parent=1 // pred_check_branch
      %75 = sbr.rel (0) target = $region45
    $region44: #{tpu_custom_call.1} parent=1 // pred_region
      %76 = dma.done [#allocation8], 2048
    $region45: #{tpu_custom_call.1} parent=1 // pred_fallthru
      _
    %v77 = vld [vmem:[#allocation2] sm:$0xff]
    %v78 = vld [vmem:[#allocation4] sm:$0xff]
    %v79 = vld [vmem:[%s2] sm:$0x1]
    %v81 = vlaneseq
    %v82 = vshrl.u32 %v81, 7
    %v83 = vsub.s32 0, %v82
    %v84 = vrot.slane %v79, %v83
    %vm86 = vcmask 64512
    %v88 = vsel %vm86, %v77, 0
    %90 = vmatprep.subr.mxu0 0.0
    %91 = vmatpush1.msra.mxu0 %v78
    %92 = vmatprep.subr.mxu0 0.0
    %93 = vmatpush1.msra.mxu0 0.0
    %94 = vmatprep.subr.mxu0 0.0
    %95 = vmatpush1.msra.mxu0 0.0
    %96 = vmatprep.subr.mxu0 0.0
    %97 = vmatpush1.msra.mxu0 0.0
    %98 = vmatprep.subr.mxu0 0.0
    %99 = vmatpush1.msra.mxu0 0.0
    %100 = vmatprep.subr.mxu0 0.0
    %101 = vmatpush1.msra.mxu0 0.0
    %102 = vmatprep.subr.mxu0 0.0
    %103 = vmatpush1.msra.mxu0 0.0
    %104 = vmatprep.subr.mxu0 0.0
    %105 = vmatpush1.msra.mxu0 0.0
    %106 = vmatprep.subr.mxu0 0.0
    %107 = vmatpush1.msra.mxu0 0.0
    %108 = vmatprep.subr.mxu0 0.0
    %109 = vmatpush1.msra.mxu0 0.0
    %110 = vmatprep.subr.mxu0 0.0
    %111 = vmatpush1.msra.mxu0 0.0
    %112 = vmatprep.subr.mxu0 0.0
    %113 = vmatpush1.msra.mxu0 0.0
    %114 = vmatprep.subr.mxu0 0.0
    %115 = vmatpush1.msra.mxu0 0.0
    %116 = vmatprep.subr.mxu0 0.0
    %117 = vmatpush1.msra.mxu0 0.0
    %118 = vmatprep.subr.mxu0 0.0
    %119 = vmatpush1.msra.mxu0 0.0
    %120 = vmatprep.subr.mxu0 0.0
    %121 = vmatpush1.msra.mxu0 0.0
    %122 = vmatprep.subr.mxu0 0.0
    %123 = vmatpush1.msra.mxu0 0.0
    %124 = vmatprep.subr.mxu0 0.0
    %125 = vmatpush1.msra.mxu0 0.0
    %126 = vmatprep.subr.mxu0 0.0
    %127 = vmatpush1.msra.mxu0 0.0
    %128 = vmatprep.subr.mxu0 0.0
    %129 = vmatpush1.msra.mxu0 0.0
    %130 = vmatprep.subr.mxu0 0.0
    %131 = vmatpush1.msra.mxu0 0.0
    %132 = vmatprep.subr.mxu0 0.0
    %133 = vmatpush1.msra.mxu0 0.0
    %134 = vmatprep.subr.mxu0 0.0
    %135 = vmatpush1.msra.mxu0 0.0
    %136 = vmatprep.subr.mxu0 0.0
    %137 = vmatpush1.msra.mxu0 0.0
    %138 = vmatprep.subr.mxu0 0.0
    %139 = vmatpush1.msra.mxu0 0.0
    %140 = vmatprep.subr.mxu0 0.0
    %141 = vmatpush1.msra.mxu0 0.0
    %142 = vmatprep.subr.mxu0 0.0
    %143 = vmatpush1.msra.mxu0 0.0
    %144 = vmatprep.subr.mxu0 0.0
    %145 = vmatpush1.msra.mxu0 0.0
    %146 = vmatprep.subr.mxu0 0.0
    %147 = vmatpush1.msra.mxu0 0.0
    %148 = vmatprep.subr.mxu0 0.0
    %149 = vmatpush1.msra.mxu0 0.0
    %150 = vmatprep.subr.mxu0 0.0
    %151 = vmatpush1.msra.mxu0 0.0
    %152 = vmatprep.subr.mxu0 0.0
    %153 = vmatpush1.msra.mxu0 0.0
    %154 = vmatprep.mubr.f32.mxu0 0.0
    %155 = vmatmul.mubr.f32.gmra.mrb[0].mxu0 %v88
    %v156 = vpop.f32.mrb[0].mxu0
    %v157 = vadd.f32 %v84, %v156
    %v158 = vpop.f32.mrb[0].mxu0
    %159 = vdwg.mxu0
    %v160 = vmax.f32 %v157, 0.0
    %v161 = vld [vmem:[#allocation6] sm:$0xff]
    %v162 = vld [vmem:[#allocation6 + $0x8] sm:$0xff]
    %v163 = vld [vmem:[#allocation6 + $0x10] sm:$0xff]
    %v164 = vld [vmem:[#allocation6 + $0x18] sm:$0xff]
    %v165 = vld [vmem:[#allocation6 + $0x20] sm:$0xff]
    %v166 = vld [vmem:[#allocation6 + $0x28] sm:$0xff]
    %v167 = vld [vmem:[#allocation6 + $0x30] sm:$0xff]
    %v168 = vld [vmem:[#allocation6 + $0x38] sm:$0xff]
    %v169 = vld [vmem:[#allocation6 + $0x40] sm:$0xff]
    %v170 = vld [vmem:[#allocation6 + $0x48] sm:$0xff]
    %v171 = vld [vmem:[#allocation6 + $0x50] sm:$0xff]
    %v172 = vld [vmem:[#allocation6 + $0x58] sm:$0xff]
    %v173 = vld [vmem:[#allocation6 + $0x60] sm:$0xff]
    %v174 = vld [vmem:[#allocation6 + $0x68] sm:$0xff]
    %v175 = vld [vmem:[#allocation6 + $0x70] sm:$0xff]
    %v176 = vld [vmem:[#allocation6 + $0x78] sm:$0xff]
    %v177 = vld [vmem:[%s4] sm:$0x1]
    %v179 = vlaneseq
    %v180 = vshrl.u32 %v179, 7
    %v181 = vsub.s32 0, %v180
    %v182 = vrot.slane %v177, %v181
    %184 = vmatprep.subr.mxu0 0.0
    %185 = vmatpush1.msra.mxu0 %v161
    %186 = vmatprep.subr.mxu0 0.0
    %187 = vmatpush1.msra.mxu0 %v162
    %188 = vmatprep.subr.mxu0 0.0
    %189 = vmatpush1.msra.mxu0 %v163
    %190 = vmatprep.subr.mxu0 0.0
    %191 = vmatpush1.msra.mxu0 %v164
    %192 = vmatprep.subr.mxu0 0.0
    %193 = vmatpush1.msra.mxu0 %v165
    %194 = vmatprep.subr.mxu0 0.0
    %195 = vmatpush1.msra.mxu0 %v166
    %196 = vmatprep.subr.mxu0 0.0
    %197 = vmatpush1.msra.mxu0 %v167
    %198 = vmatprep.subr.mxu0 0.0
    %199 = vmatpush1.msra.mxu0 %v168
    %200 = vmatprep.subr.mxu0 0.0
    %201 = vmatpush1.msra.mxu0 %v169
    %202 = vmatprep.subr.mxu0 0.0
    %203 = vmatpush1.msra.mxu0 %v170
    %204 = vmatprep.subr.mxu0 0.0
    %205 = vmatpush1.msra.mxu0 %v171
    %206 = vmatprep.subr.mxu0 0.0
    %207 = vmatpush1.msra.mxu0 %v172
    %208 = vmatprep.subr.mxu0 0.0
    %209 = vmatpush1.msra.mxu0 %v173
    %210 = vmatprep.subr.mxu0 0.0
    %211 = vmatpush1.msra.mxu0 %v174
    %212 = vmatprep.subr.mxu0 0.0
    %213 = vmatpush1.msra.mxu0 %v175
    %214 = vmatprep.subr.mxu0 0.0
    %215 = vmatpush1.msra.mxu0 %v176
    %216 = vmatprep.subr.mxu0 0.0
    %217 = vmatpush1.msra.mxu0 0.0
    %218 = vmatprep.subr.mxu0 0.0
    %219 = vmatpush1.msra.mxu0 0.0
    %220 = vmatprep.subr.mxu0 0.0
    %221 = vmatpush1.msra.mxu0 0.0
    %222 = vmatprep.subr.mxu0 0.0
    %223 = vmatpush1.msra.mxu0 0.0
    %224 = vmatprep.subr.mxu0 0.0
    %225 = vmatpush1.msra.mxu0 0.0
    %226 = vmatprep.subr.mxu0 0.0
    %227 = vmatpush1.msra.mxu0 0.0
    %228 = vmatprep.subr.mxu0 0.0
    %229 = vmatpush1.msra.mxu0 0.0
    %230 = vmatprep.subr.mxu0 0.0
    %231 = vmatpush1.msra.mxu0 0.0
    %232 = vmatprep.subr.mxu0 0.0
    %233 = vmatpush1.msra.mxu0 0.0
    %234 = vmatprep.subr.mxu0 0.0
    %235 = vmatpush1.msra.mxu0 0.0
    %236 = vmatprep.subr.mxu0 0.0
    %237 = vmatpush1.msra.mxu0 0.0
    %238 = vmatprep.subr.mxu0 0.0
    %239 = vmatpush1.msra.mxu0 0.0
    %240 = vmatprep.subr.mxu0 0.0
    %241 = vmatpush1.msra.mxu0 0.0
    %242 = vmatprep.subr.mxu0 0.0
    %243 = vmatpush1.msra.mxu0 0.0
    %244 = vmatprep.subr.mxu0 0.0
    %245 = vmatpush1.msra.mxu0 0.0
    %246 = vmatprep.subr.mxu0 0.0
    %247 = vmatpush1.msra.mxu0 0.0
    %248 = vmatprep.mubr.f32.mxu0 0.0
    %249 = vmatmul.mubr.f32.gmra.mrb[0].mxu0 %v160
    %v250 = vpop.f32.mrb[0].mxu0
    %v251 = vadd.f32 %v182, %v250
    %v252 = vpop.f32.mrb[0].mxu0
    %253 = vdwg.mxu0
    %v254 = vmax.f32 %v251, 0.0
    %v255 = vld [vmem:[#allocation7] sm:$0xff]
    %v256 = vld [vmem:[#allocation7 + $0x8] sm:$0xff]
    %v257 = vld [vmem:[#allocation7 + $0x10] sm:$0xff]
    %v258 = vld [vmem:[#allocation7 + $0x18] sm:$0xff]
    %v259 = vld [vmem:[#allocation7 + $0x20] sm:$0xff]
    %v260 = vld [vmem:[#allocation7 + $0x28] sm:$0xff]
    %v261 = vld [vmem:[#allocation7 + $0x30] sm:$0xff]
    %v262 = vld [vmem:[#allocation7 + $0x38] sm:$0xff]
    %v263 = vld [vmem:[#allocation7 + $0x40] sm:$0xff]
    %v264 = vld [vmem:[#allocation7 + $0x48] sm:$0xff]
    %v265 = vld [vmem:[#allocation7 + $0x50] sm:$0xff]
    %v266 = vld [vmem:[#allocation7 + $0x58] sm:$0xff]
    %v267 = vld [vmem:[#allocation7 + $0x60] sm:$0xff]
    %v268 = vld [vmem:[#allocation7 + $0x68] sm:$0xff]
    %v269 = vld [vmem:[#allocation7 + $0x70] sm:$0xff]
    %v270 = vld [vmem:[#allocation7 + $0x78] sm:$0xff]
    %v271 = vld [vmem:[%s6] sm:$0x1]
    %v273 = vlaneseq
    %v274 = vshrl.u32 %v273, 7
    %v275 = vsub.s32 0, %v274
    %v276 = vrot.slane %v271, %v275
    %278 = vmatprep.subr.mxu0 0.0
    %279 = vmatpush1.msra.mxu0 %v255
    %280 = vmatprep.subr.mxu0 0.0
    %281 = vmatpush1.msra.mxu0 %v256
    %282 = vmatprep.subr.mxu0 0.0
    %283 = vmatpush1.msra.mxu0 %v257
    %284 = vmatprep.subr.mxu0 0.0
    %285 = vmatpush1.msra.mxu0 %v258
    %286 = vmatprep.subr.mxu0 0.0
    %287 = vmatpush1.msra.mxu0 %v259
    %288 = vmatprep.subr.mxu0 0.0
    %289 = vmatpush1.msra.mxu0 %v260
    %290 = vmatprep.subr.mxu0 0.0
    %291 = vmatpush1.msra.mxu0 %v261
    %292 = vmatprep.subr.mxu0 0.0
    %293 = vmatpush1.msra.mxu0 %v262
    %294 = vmatprep.subr.mxu0 0.0
    %295 = vmatpush1.msra.mxu0 %v263
    %296 = vmatprep.subr.mxu0 0.0
    %297 = vmatpush1.msra.mxu0 %v264
    %298 = vmatprep.subr.mxu0 0.0
    %299 = vmatpush1.msra.mxu0 %v265
    %300 = vmatprep.subr.mxu0 0.0
    %301 = vmatpush1.msra.mxu0 %v266
    %302 = vmatprep.subr.mxu0 0.0
    %303 = vmatpush1.msra.mxu0 %v267
    %304 = vmatprep.subr.mxu0 0.0
    %305 = vmatpush1.msra.mxu0 %v268
    %306 = vmatprep.subr.mxu0 0.0
    %307 = vmatpush1.msra.mxu0 %v269
    %308 = vmatprep.subr.mxu0 0.0
    %309 = vmatpush1.msra.mxu0 %v270
    %310 = vmatprep.subr.mxu0 0.0
    %311 = vmatpush1.msra.mxu0 0.0
    %312 = vmatprep.subr.mxu0 0.0
    %313 = vmatpush1.msra.mxu0 0.0
    %314 = vmatprep.subr.mxu0 0.0
    %315 = vmatpush1.msra.mxu0 0.0
    %316 = vmatprep.subr.mxu0 0.0
    %317 = vmatpush1.msra.mxu0 0.0
    %318 = vmatprep.subr.mxu0 0.0
    %319 = vmatpush1.msra.mxu0 0.0
    %320 = vmatprep.subr.mxu0 0.0
    %321 = vmatpush1.msra.mxu0 0.0
    %322 = vmatprep.subr.mxu0 0.0
    %323 = vmatpush1.msra.mxu0 0.0
    %324 = vmatprep.subr.mxu0 0.0
    %325 = vmatpush1.msra.mxu0 0.0
    %326 = vmatprep.subr.mxu0 0.0
    %327 = vmatpush1.msra.mxu0 0.0
    %328 = vmatprep.subr.mxu0 0.0
    %329 = vmatpush1.msra.mxu0 0.0
    %330 = vmatprep.subr.mxu0 0.0
    %331 = vmatpush1.msra.mxu0 0.0
    %332 = vmatprep.subr.mxu0 0.0
    %333 = vmatpush1.msra.mxu0 0.0
    %334 = vmatprep.subr.mxu0 0.0
    %335 = vmatpush1.msra.mxu0 0.0
    %336 = vmatprep.subr.mxu0 0.0
    %337 = vmatpush1.msra.mxu0 0.0
    %338 = vmatprep.subr.mxu0 0.0
    %339 = vmatpush1.msra.mxu0 0.0
    %340 = vmatprep.subr.mxu0 0.0
    %341 = vmatpush1.msra.mxu0 0.0
    %342 = vmatprep.mubr.f32.mxu0 0.0
    %343 = vmatmul.mubr.f32.gmra.mrb[0].mxu0 %v254
    %v344 = vpop.f32.mrb[0].mxu0
    %v345 = vadd.f32 %v276, %v344
    %v346 = vpop.f32.mrb[0].mxu0
    %347 = vdwg.mxu0
    %vm348 = vcmask 15360
    %349 = vst.msk [vmem:[%s7] sm:$0xff] %vm348, %v345
    // Predicated region
    $region46: #{tpu_custom_call.1} parent=1 // pred_check
      _
    $region47: #{tpu_custom_call.1} parent=1 // pred_check_branch
      %351 = sbr.rel (0) target = $region49
    $region48: #{tpu_custom_call.1} parent=1 // pred_region
      _
    $region49: #{tpu_custom_call.1} parent=1 // pred_fallthru
      _
    // Predicated region
    $region50: #{tpu_custom_call.1} parent=1 // pred_check
      _
    $region51: #{tpu_custom_call.1} parent=1 // pred_check_branch
      %353 = sbr.rel (0) target = $region53
    $region52: #{tpu_custom_call.1} parent=1 // pred_region
      _
    $region53: #{tpu_custom_call.1} parent=1 // pred_fallthru
      _
    %354 = vsyncpa [#allocation3], 1
    %355 = vsyncpa [#allocation5], 1
    %356 = vsyncpa [#allocation8], 1

</llo_original>
